<compile_context>
chip_gen: v7x
topology: tpu7x:2x2x1
jax: 0.10.0
libtpu: 0.0.40
codegen_flags: <defaults>
</compile_context>

<pallas_src>
import functools

import jax
import jax.numpy as jnp
from jax.experimental import pallas as pl
from jax.experimental.pallas import tpu as pltpu

K = 2
BN_EPS = 1e-5
LANES = 128          # lane-dense padded width for hidden/output features


def network_kernel(x_ref, w1_ref, params_ref, o_ref):
    # x:      (N, d_in)
    # w1:     (d_in, LANES)     columns >= K are zero
    # params: (8, LANES) packed rows:
    #   0: b1 (pad 0)   1: gamma (pad 0)   2: beta (pad 0)   3: b2 (pad 0)
    #   4..4+K-1: w2.T rows (hidden-unit k -> all outputs, pad 0)
    # o:      (N, 2*LANES)      lanes [0:128] sigmoid out, [128:256] BN out
    x = x_ref[...]
    params = params_ref[...]

    b1 = params[0:1, :]
    gamma = params[1:2, :]
    beta = params[2:3, :]
    b2 = params[3:4, :]

    # ---- layer1 + ReLU (single MXU matmul, lane-dense 128-wide output) ----
    h = jnp.dot(x, w1_ref[...], preferred_element_type=jnp.float32) + b1
    h = jnp.maximum(h, 0.0)                                 # (N, LANES)

    # ---- BatchNorm1d (training mode, single-pass biased batch statistics) --
    inv_n = 1.0 / h.shape[0]
    s1 = jnp.sum(h, axis=0, keepdims=True)                  # (1, LANES)
    s2 = jnp.sum(h * h, axis=0, keepdims=True)              # (1, LANES)
    mean = s1 * inv_n
    var = jnp.maximum(s2 * inv_n - mean * mean, 0.0)        # clamp for safety
    inv_std = jax.lax.rsqrt(var + BN_EPS)
    a = (h - mean) * (inv_std * gamma) + beta               # padded lanes stay 0
    o_ref[:, LANES:] = a                                    # aligned 128-lane store

    # ---- layer2 as VPU broadcast FMAs over the K=2 contraction + sigmoid ---
    z = b2
    for k in range(K):
        w2_row_k = params[4 + k:5 + k, :]                   # (1, LANES)
        z = z + a[:, k:k + 1] * w2_row_k                    # lane-broadcast FMA
    o_ref[:, :LANES] = jax.nn.sigmoid(z)                    # aligned 128-lane store


def prepare_params(w1, b1, w2, b2, gamma, beta):
    """One-time parameter prep (transpose, pad, pack). Hoisted out of the
    per-call path. PyTorch layouts: w1 (K, d_in), b1 (K,), w2 (d_out, K),
    b2 (d_out,), gamma/beta (K,)."""
    w1 = jnp.asarray(w1, jnp.float32)
    w2 = jnp.asarray(w2, jnp.float32)
    d_in = w1.shape[1]
    d_out = w2.shape[0]
    assert K <= LANES and d_out <= LANES and K + 4 <= 8

    # layer1 weight: (d_in, LANES), zero beyond column K
    w1_pad = jnp.zeros((d_in, LANES), jnp.float32).at[:, :K].set(w1.T)

    # packed per-feature parameter tile (8, LANES)
    params = jnp.zeros((8, LANES), jnp.float32)
    params = params.at[0, :K].set(jnp.asarray(b1, jnp.float32))
    params = params.at[1, :K].set(jnp.asarray(gamma, jnp.float32))
    params = params.at[2, :K].set(jnp.asarray(beta, jnp.float32))
    params = params.at[3, :d_out].set(jnp.asarray(b2, jnp.float32))
    params = params.at[4:4 + K, :d_out].set(w2.T)           # row k = w2[:, k]
    return w1_pad, params, d_out


@functools.partial(jax.jit, static_argnames=("d_out", "return_padded"))
def network_forward(x, w1_pad, params, *, d_out, return_padded=False):
    """x: (N, d_in) float32.

    Returns (sigmoid_out (N, d_out), bn_out (N, K)) — or, if
    return_padded=True, the single (N, 256) padded slab (sigmoid in lanes
    [0:128] — lanes >= d_out hold sigmoid(0)=0.5 — and BN activations in
    lanes [128:256]) so consumers can fuse the slicing themselves.
    """
    x = jnp.asarray(x, jnp.float32)
    N, d_in = x.shape

    vmem = pl.BlockSpec(memory_space=pltpu.MemorySpace.VMEM)

    bytes_accessed = 4 * (x.size + w1_pad.size + params.size + N * 2 * LANES)
    cost = pl.CostEstimate(
        flops=2 * N * d_in * LANES + 12 * N * LANES,         # matmul + elementwise
        transcendentals=N * LANES + LANES,                   # sigmoid + rsqrt
        bytes_accessed=bytes_accessed,
    )

    out = pl.pallas_call(
        network_kernel,
        out_shape=jax.ShapeDtypeStruct((N, 2 * LANES), jnp.float32),
        in_specs=[vmem, vmem, vmem],
        out_specs=vmem,
        compiler_params=pltpu.CompilerParams(
            vmem_limit_bytes=32 * 1024 * 1024),
        cost_estimate=cost,
    )(x, w1_pad, params)

    if return_padded:
        return out
    return out[:, :d_out], out[:, LANES:LANES + K]


def reference_forward(x, w1, b1, w2, b2, gamma, beta):
    """Pure-JAX reference mirroring the PyTorch forward (training-mode BN)."""
    h = jnp.maximum(x @ w1.T + b1, 0.0)
    mean = jnp.mean(h, axis=0, keepdims=True)
    var = jnp.mean((h - mean) ** 2, axis=0, keepdims=True)
    a = (h - mean) / jnp.sqrt(var + BN_EPS) * gamma + beta
    y = jax.nn.sigmoid(a @ w2.T + b2)
    return y, a


if __name__ == "__main__":
    key = jax.random.PRNGKey(0)
    N, d_in, d_out = 8, 16, 4

    k_x, k_w1, k_b1, k_w2, k_b2, k_g, k_be = jax.random.split(key, 7)

    x = jax.random.normal(k_x, (N, d_in), dtype=jnp.float32)

    # Deterministic parameter init (uniform +/- 1/sqrt(fan_in), PyTorch-like)
    bound1 = 1.0 / jnp.sqrt(d_in)
    w1 = jax.random.uniform(k_w1, (K, d_in), minval=-bound1, maxval=bound1)
    b1 = jax.random.uniform(k_b1, (K,), minval=-bound1, maxval=bound1)
    bound2 = 1.0 / jnp.sqrt(K)
    w2 = jax.random.uniform(k_w2, (d_out, K), minval=-bound2, maxval=bound2)
    b2 = jax.random.uniform(k_b2, (d_out,), minval=-bound2, maxval=bound2)
    # BatchNorm affine params (default would be gamma=1, beta=0; perturb for test)
    gamma = 1.0 + 0.1 * jax.random.normal(k_g, (K,))
    beta = 0.1 * jax.random.normal(k_be, (K,))

    # One-time prep (hoisted out of the per-call path)
    w1_pad, params, d_out_s = prepare_params(w1, b1, w2, b2, gamma, beta)
    jax.block_until_ready((w1_pad, params))

    y, a = network_forward(x, w1_pad, params, d_out=d_out_s)
    jax.block_until_ready((y, a))

    y_ref, a_ref = reference_forward(x, w1, b1, w2, b2, gamma, beta)
    assert y.shape == (N, d_out) and a.shape == (N, K)
    # Slightly relaxed tolerance: the kernel uses the single-pass (sumsq) BN
    # variance while the reference uses the two-pass form.
    assert jnp.allclose(y, y_ref, atol=1e-4, rtol=1e-4)
    assert jnp.allclose(a, a_ref, atol=1e-4, rtol=1e-4)

    print("KERNEL_OK")
</pallas_src>

<mosaic_0001>
module attributes {stable_mosaic.version = 11 : i64} {
  func.func @network_kernel(%arg0: memref<8x16xf32, #tpu.memory_space<vmem>>, %arg1: memref<16x128xf32, #tpu.memory_space<vmem>>, %arg2: memref<8x128xf32, #tpu.memory_space<vmem>>, %arg3: memref<8x256xf32, #tpu.memory_space<vmem>>) attributes {dimension_semantics = [], scalar_prefetch = 0 : i64, scratch_operands = 0 : i64, tpu.core_type = #tpu.core_type<tc>} {
    %c0 = arith.constant 0 : index
    %c0_0 = arith.constant 0 : index
    %0 = vector.load %arg0[%c0, %c0_0] : memref<8x16xf32, #tpu.memory_space<vmem>>, vector<8x16xf32>
    %c0_1 = arith.constant 0 : index
    %c0_2 = arith.constant 0 : index
    %1 = vector.load %arg2[%c0_1, %c0_2] : memref<8x128xf32, #tpu.memory_space<vmem>>, vector<8x128xf32>
    %2 = vector.extract_strided_slice %1 {offsets = [0, 0], sizes = [1, 128], strides = [1, 1]} : vector<8x128xf32> to vector<1x128xf32>
    %3 = vector.extract_strided_slice %1 {offsets = [1, 0], sizes = [1, 128], strides = [1, 1]} : vector<8x128xf32> to vector<1x128xf32>
    %4 = vector.extract_strided_slice %1 {offsets = [2, 0], sizes = [1, 128], strides = [1, 1]} : vector<8x128xf32> to vector<1x128xf32>
    %5 = vector.extract_strided_slice %1 {offsets = [3, 0], sizes = [1, 128], strides = [1, 1]} : vector<8x128xf32> to vector<1x128xf32>
    %c0_3 = arith.constant 0 : index
    %c0_4 = arith.constant 0 : index
    %6 = vector.load %arg1[%c0_3, %c0_4] : memref<16x128xf32, #tpu.memory_space<vmem>>, vector<16x128xf32>
    %cst = arith.constant dense<0.000000e+00> : vector<8x128xf32>
    %7 = tpu.matmul %0, %6, %cst {dimension_numbers = #tpu.dot_dimension_numbers<[1], [0], [0], [1], [0, 0, 1, 1], [], []>} : vector<8x16xf32>, vector<16x128xf32>, vector<8x128xf32> -> vector<8x128xf32>
    %8 = vector.broadcast %2 : vector<1x128xf32> to vector<8x128xf32>
    %9 = arith.addf %7, %8 : vector<8x128xf32>
    %cst_5 = arith.constant 0.000000e+00 : f32
    %10 = vector.broadcast %cst_5 : f32 to vector<8x128xf32>
    %11 = arith.maximumf %9, %10 : vector<8x128xf32>
    %cst_6 = arith.constant dense<0.000000e+00> : vector<128xf32>
    %12 = vector.multi_reduction <add>, %11, %cst_6 [0] : vector<8x128xf32> to vector<128xf32>
    %13 = vector.shape_cast %12 : vector<128xf32> to vector<1x128xf32>
    %14 = arith.mulf %11, %11 : vector<8x128xf32>
    %cst_7 = arith.constant dense<0.000000e+00> : vector<128xf32>
    %15 = vector.multi_reduction <add>, %14, %cst_7 [0] : vector<8x128xf32> to vector<128xf32>
    %16 = vector.shape_cast %15 : vector<128xf32> to vector<1x128xf32>
    %cst_8 = arith.constant 1.250000e-01 : f32
    %17 = vector.broadcast %cst_8 : f32 to vector<1x128xf32>
    %18 = arith.mulf %13, %17 : vector<1x128xf32>
    %cst_9 = arith.constant 1.250000e-01 : f32
    %19 = vector.broadcast %cst_9 : f32 to vector<1x128xf32>
    %20 = arith.mulf %16, %19 : vector<1x128xf32>
    %21 = arith.mulf %18, %18 : vector<1x128xf32>
    %22 = arith.subf %20, %21 : vector<1x128xf32>
    %cst_10 = arith.constant 0.000000e+00 : f32
    %23 = vector.broadcast %cst_10 : f32 to vector<1x128xf32>
    %24 = arith.maximumf %22, %23 : vector<1x128xf32>
    %cst_11 = arith.constant 9.99999974E-6 : f32
    %25 = vector.broadcast %cst_11 : f32 to vector<1x128xf32>
    %26 = arith.addf %24, %25 : vector<1x128xf32>
    %27 = math.rsqrt %26 : vector<1x128xf32>
    %28 = vector.broadcast %18 : vector<1x128xf32> to vector<8x128xf32>
    %29 = arith.subf %11, %28 : vector<8x128xf32>
    %30 = arith.mulf %27, %3 : vector<1x128xf32>
    %31 = vector.broadcast %30 : vector<1x128xf32> to vector<8x128xf32>
    %32 = arith.mulf %29, %31 : vector<8x128xf32>
    %33 = vector.broadcast %4 : vector<1x128xf32> to vector<8x128xf32>
    %34 = arith.addf %32, %33 : vector<8x128xf32>
    %c0_12 = arith.constant 0 : index
    %c128 = arith.constant 128 : index
    %35 = vector.load %arg3[%c0_12, %c128] : memref<8x256xf32, #tpu.memory_space<vmem>>, vector<8x128xf32>
    tpu.vector_store %arg3[%c0_12, %c128], %34 {strides = array<i32>} : memref<8x256xf32, #tpu.memory_space<vmem>>, vector<8x128xf32>,
    %36 = vector.extract_strided_slice %1 {offsets = [4, 0], sizes = [1, 128], strides = [1, 1]} : vector<8x128xf32> to vector<1x128xf32>
    %37 = vector.extract_strided_slice %34 {offsets = [0, 0], sizes = [8, 1], strides = [1, 1]} : vector<8x128xf32> to vector<8x1xf32>
    %38 = vector.broadcast %37 : vector<8x1xf32> to vector<8x128xf32>
    %39 = vector.broadcast %36 : vector<1x128xf32> to vector<8x128xf32>
    %40 = arith.mulf %38, %39 : vector<8x128xf32>
    %41 = vector.broadcast %5 : vector<1x128xf32> to vector<8x128xf32>
    %42 = arith.addf %41, %40 : vector<8x128xf32>
    %43 = vector.extract_strided_slice %1 {offsets = [5, 0], sizes = [1, 128], strides = [1, 1]} : vector<8x128xf32> to vector<1x128xf32>
    %44 = vector.extract_strided_slice %34 {offsets = [0, 1], sizes = [8, 1], strides = [1, 1]} : vector<8x128xf32> to vector<8x1xf32>
    %45 = vector.broadcast %44 : vector<8x1xf32> to vector<8x128xf32>
    %46 = vector.broadcast %43 : vector<1x128xf32> to vector<8x128xf32>
    %47 = arith.mulf %45, %46 : vector<8x128xf32>
    %48 = arith.addf %42, %47 : vector<8x128xf32>
    %49 = arith.negf %48 : vector<8x128xf32>
    %50 = math.exp %49 : vector<8x128xf32>
    %cst_13 = arith.constant 1.000000e+00 : f32
    %51 = vector.broadcast %cst_13 : f32 to vector<8x128xf32>
    %52 = arith.addf %51, %50 : vector<8x128xf32>
    %53 = arith.divf %51, %52 : vector<8x128xf32>
    %c0_14 = arith.constant 0 : index
    %c0_15 = arith.constant 0 : index
    %54 = vector.load %arg3[%c0_14, %c0_15] : memref<8x256xf32, #tpu.memory_space<vmem>>, vector<8x128xf32>
    tpu.vector_store %arg3[%c0_14, %c0_15], %53 {strides = array<i32>} : memref<8x256xf32, #tpu.memory_space<vmem>>, vector<8x128xf32>,
    return
  }
}

</mosaic_0001>

<llo_original>
// kernel: network_forward.1
$region0: #{network_forward.1}
  #allocation0 [shape = 'u32[]', space=smem, size = 0x4, offset = 0x4, fixed_abs, tag = 'smem constant byte address 0x4 - core index']
  #allocation1 [shape = 'u32[144,128]{1,0:T(1,128)}', space=vmem, size = 0x12000, scoped, tag = 'internal scratch']
  %s0 = inlined_call_operand.hbm [shape: f32[8,16], index: 0, kind: input, shape index: {}]
  %s1 = inlined_call_operand.hbm [shape: f32[16,128], index: 1, kind: input, shape index: {}]
  %s2 = inlined_call_operand.hbm [shape: f32[8,128], index: 2, kind: input, shape index: {}]
  %s3 = inlined_call_operand.vmem [shape: f32[8,256], index: 3, kind: output, shape index: {}]
  %s4 = sld [smem:[#allocation0]]
  $region34: #{network_forward.1} parent=0
    _
  %s6 = ssub.s32 1, %s4
  %s7 = scalar_select 0, %s6, %s4
  $region1: #{network_forward.1} parent=0
    #allocation2 [shape = 'u8[4096]{0}', space=vmem, size = 0x1000, scoped, tag = 'input window, operand 0, single buffered']
    #allocation3 [shape = 's32[1]{0}', space=sflag, size = 0x4, scoped, tag = 'scoped memory for network_forward.1']
    #allocation4 [shape = 'u8[8192]{0}', space=vmem, size = 0x2000, scoped, tag = 'input window, operand 1, single buffered']
    #allocation5 [shape = 's32[1]{0}', space=sflag, size = 0x4, scoped, tag = 'scoped memory for network_forward.1']
    #allocation6 [shape = 'u8[4096]{0}', space=vmem, size = 0x1000, scoped, tag = 'input window, operand 2, single buffered']
    %8 = vsyncpa [#allocation3], 0
    %9 = vsyncpa [#allocation5], 0
    // Predicated region
    $region2: #{network_forward.1} parent=1 // pred_check
      _
    $region3: #{network_forward.1} parent=1 // pred_check_branch
      %11 = sbr.rel (0) target = $region5
    $region4: #{network_forward.1} parent=1 // pred_region
      %s13 = ssub.s32 128, 128
      %14 = vsyncadd [#allocation3], %s13
      %s16 = sshll.u32 [#allocation2], 4
      %s17 = int_to_ptr.vmem [resolvable:$true] %s16
      %19 = dma.hbm_to_vmem [thread:$0]  %s0, 128, %s17, [#allocation3]
    $region5: #{network_forward.1} parent=1 // pred_fallthru
      _
    // Predicated region
    $region6: #{network_forward.1} parent=1 // pred_check
      _
    $region7: #{network_forward.1} parent=1 // pred_check_branch
      %21 = sbr.rel (0) target = $region9
    $region8: #{network_forward.1} parent=1 // pred_region
      %s23 = ssub.s32 256, 256
      %24 = vsyncadd [#allocation5], %s23
      %s25 = sshll.u32 [#allocation4], 4
      %s26 = int_to_ptr.vmem [resolvable:$true] %s25
      %31 = dma.hbm_to_vmem [thread:$0]  %s1, 256, %s26, [#allocation5], 128, 128, 8
    $region9: #{network_forward.1} parent=1 // pred_fallthru
      _
    // Predicated region
    $region10: #{network_forward.1} parent=1 // pred_check
      _
    $region11: #{network_forward.1} parent=1 // pred_check_branch
      %33 = sbr.rel (0) target = $region13
    $region12: #{network_forward.1} parent=1 // pred_region
      %s35 = ssub.s32 128, 128
      %36 = vsyncadd [#allocation5], %s35
      %s38 = sshll.u32 [#allocation6], 4
      %s39 = int_to_ptr.vmem [resolvable:$true] %s38
      %41 = dma.hbm_to_vmem [thread:$0]  %s2, 128, %s39, [#allocation5]
    $region13: #{network_forward.1} parent=1 // pred_fallthru
      _
    // Predicated region
    $region14: #{network_forward.1} parent=1 // pred_check
      _
    $region15: #{network_forward.1} parent=1 // pred_check_branch
      %43 = sbr.rel (0) target = $region17
    $region16: #{network_forward.1} parent=1 // pred_region
      %44 = dma.done [#allocation3], 128
    $region17: #{network_forward.1} parent=1 // pred_fallthru
      _
    // Predicated region
    $region18: #{network_forward.1} parent=1 // pred_check
      _
    $region19: #{network_forward.1} parent=1 // pred_check_branch
      %46 = sbr.rel (0) target = $region21
    $region20: #{network_forward.1} parent=1 // pred_region
      %47 = dma.done [#allocation5], 256
    $region21: #{network_forward.1} parent=1 // pred_fallthru
      _
    // Predicated region
    $region22: #{network_forward.1} parent=1 // pred_check
      _
    $region23: #{network_forward.1} parent=1 // pred_check_branch
      %49 = sbr.rel (0) target = $region25
    $region24: #{network_forward.1} parent=1 // pred_region
      %50 = dma.done [#allocation5], 128
    $region25: #{network_forward.1} parent=1 // pred_fallthru
      _
    %v51 = vld [vmem:[#allocation2] sm:$0xff]
    %v52 = vld [vmem:[#allocation6] sm:$0xff]
    %v53 = vld [vmem:[#allocation4] sm:$0xff]
    %v54 = vld [vmem:[#allocation4 + $0x8] sm:$0xff]
    %v55 = vlaneseq
    %v56 = vshrl.u32 %v55, 7
    %v57 = vsub.s32 0, %v56
    %v58 = vrot.slane %v52, %v57
    %vm59 = vcmask 130048
    %v61 = vsel %vm59, %v51, 0
    %63 = vmatprep.subr.mxu0 0.0
    %64 = vmatpush1.msra.mxu0 %v53
    %65 = vmatprep.subr.mxu0 0.0
    %66 = vmatpush1.msra.mxu0 %v54
    %67 = vmatprep.subr.mxu0 0.0
    %68 = vmatpush1.msra.mxu0 0.0
    %69 = vmatprep.subr.mxu0 0.0
    %70 = vmatpush1.msra.mxu0 0.0
    %71 = vmatprep.subr.mxu0 0.0
    %72 = vmatpush1.msra.mxu0 0.0
    %73 = vmatprep.subr.mxu0 0.0
    %74 = vmatpush1.msra.mxu0 0.0
    %75 = vmatprep.subr.mxu0 0.0
    %76 = vmatpush1.msra.mxu0 0.0
    %77 = vmatprep.subr.mxu0 0.0
    %78 = vmatpush1.msra.mxu0 0.0
    %79 = vmatprep.subr.mxu0 0.0
    %80 = vmatpush1.msra.mxu0 0.0
    %81 = vmatprep.subr.mxu0 0.0
    %82 = vmatpush1.msra.mxu0 0.0
    %83 = vmatprep.subr.mxu0 0.0
    %84 = vmatpush1.msra.mxu0 0.0
    %85 = vmatprep.subr.mxu0 0.0
    %86 = vmatpush1.msra.mxu0 0.0
    %87 = vmatprep.subr.mxu0 0.0
    %88 = vmatpush1.msra.mxu0 0.0
    %89 = vmatprep.subr.mxu0 0.0
    %90 = vmatpush1.msra.mxu0 0.0
    %91 = vmatprep.subr.mxu0 0.0
    %92 = vmatpush1.msra.mxu0 0.0
    %93 = vmatprep.subr.mxu0 0.0
    %94 = vmatpush1.msra.mxu0 0.0
    %95 = vmatprep.subr.mxu0 0.0
    %96 = vmatpush1.msra.mxu0 0.0
    %97 = vmatprep.subr.mxu0 0.0
    %98 = vmatpush1.msra.mxu0 0.0
    %99 = vmatprep.subr.mxu0 0.0
    %100 = vmatpush1.msra.mxu0 0.0
    %101 = vmatprep.subr.mxu0 0.0
    %102 = vmatpush1.msra.mxu0 0.0
    %103 = vmatprep.subr.mxu0 0.0
    %104 = vmatpush1.msra.mxu0 0.0
    %105 = vmatprep.subr.mxu0 0.0
    %106 = vmatpush1.msra.mxu0 0.0
    %107 = vmatprep.subr.mxu0 0.0
    %108 = vmatpush1.msra.mxu0 0.0
    %109 = vmatprep.subr.mxu0 0.0
    %110 = vmatpush1.msra.mxu0 0.0
    %111 = vmatprep.subr.mxu0 0.0
    %112 = vmatpush1.msra.mxu0 0.0
    %113 = vmatprep.subr.mxu0 0.0
    %114 = vmatpush1.msra.mxu0 0.0
    %115 = vmatprep.subr.mxu0 0.0
    %116 = vmatpush1.msra.mxu0 0.0
    %117 = vmatprep.subr.mxu0 0.0
    %118 = vmatpush1.msra.mxu0 0.0
    %119 = vmatprep.subr.mxu0 0.0
    %120 = vmatpush1.msra.mxu0 0.0
    %121 = vmatprep.subr.mxu0 0.0
    %122 = vmatpush1.msra.mxu0 0.0
    %123 = vmatprep.subr.mxu0 0.0
    %124 = vmatpush1.msra.mxu0 0.0
    %125 = vmatprep.subr.mxu0 0.0
    %126 = vmatpush1.msra.mxu0 0.0
    %127 = vmatprep.mubr.f32.mxu0 0.0
    %128 = vmatmul.mubr.f32.gmra.mrb[0].mxu0 %v61
    %v129 = vpop.f32.mrb[0].mxu0
    %v130 = vadd.f32 %v58, %v129
    %v131 = vpop.f32.mrb[0].mxu0
    %132 = vdwg.mxu0
    %v133 = vmax.f32 %v130, 0.0
    %v134 = vrot.slane %v133, 4
    %v135 = vadd.f32 %v133, %v134
    %v136 = vrot.slane %v135, 2
    %v137 = vadd.f32 %v135, %v136
    %v138 = vrot.slane %v137, 1
    %v139 = vadd.f32 %v137, %v138
    %v140 = vmul.f32 %v133, %v133
    %v141 = vrot.slane %v140, 4
    %v142 = vadd.f32 %v140, %v141
    %v143 = vrot.slane %v142, 2
    %v144 = vadd.f32 %v142, %v143
    %v145 = vrot.slane %v144, 1
    %v146 = vadd.f32 %v144, %v145
    %v147 = vmul.f32 %v139, 0.125
    %v148 = vmul.f32 %v146, 0.125
    %v149 = vmul.f32 %v147, %v147
    %v150 = vsub.f32 %v148, %v149
    %v151 = vmax.f32 %v150, 0.0
    %v152 = vadd.f32 %v151, 1e-05
    %v153 = vrsqrt.pop %v152
    %v154 = vsub.f32 %v133, %v147
    %v155 = vmul.f32 %v153, %v52
    %v156 = vlaneseq
    %v157 = vshrl.u32 %v156, 7
    %v158 = vsub.s32 1, %v157
    %v159 = vrot.slane %v155, %v158
    %v160 = vmul.f32 %v154, %v159
    %v161 = vlaneseq
    %v162 = vshrl.u32 %v161, 7
    %v163 = vsub.s32 2, %v162
    %v164 = vrot.slane %v52, %v163
    %v165 = vadd.f32 %v160, %v164
    %166 = vst [vmem:[%s3 + $0x8] sm:$0xff] %v165
    %168 = vset.pattern.permute.xlu0 0
    %169 = vperm.xlu0 %168, %v165
    %v170 = vpop.permute.xlu0 %169
    %v172 = vlaneseq
    %v173 = vshrl.u32 %v172, 7
    %v174 = vsub.s32 4, %v173
    %v175 = vrot.slane %v52, %v174
    %v176 = vmul.f32 %v170, %v175
    %v177 = vlaneseq
    %v178 = vshrl.u32 %v177, 7
    %v179 = vsub.s32 3, %v178
    %v180 = vrot.slane %v52, %v179
    %v181 = vadd.f32 %v180, %v176
    %182 = vset.pattern.permute.xlu0 1
    %183 = vperm.xlu0 %182, %v165
    %v184 = vpop.permute.xlu0 %183
    %v186 = vlaneseq
    %v187 = vshrl.u32 %v186, 7
    %v188 = vsub.s32 5, %v187
    %v189 = vrot.slane %v52, %v188
    %v190 = vmul.f32 %v184, %v189
    %v191 = vadd.f32 %v181, %v190
    %v192 = vxor.u32 %v191, 2147483648
    %v193 = vmul.f32 %v192, 1.442695
    %v194 = vpow.pop %v193
    %v195 = vadd.f32 %v194, 1.0
    %v196 = vrcp.pop %v195
    %v197 = vmul.f32 1.0, %v196
    %198 = vst [vmem:[%s3] sm:$0xff] %v197
    // Predicated region
    $region26: #{network_forward.1} parent=1 // pred_check
      _
    $region27: #{network_forward.1} parent=1 // pred_check_branch
      %200 = sbr.rel (0) target = $region29
    $region28: #{network_forward.1} parent=1 // pred_region
      _
    $region29: #{network_forward.1} parent=1 // pred_fallthru
      _
    // Predicated region
    $region30: #{network_forward.1} parent=1 // pred_check
      _
    $region31: #{network_forward.1} parent=1 // pred_check_branch
      %202 = sbr.rel (0) target = $region33
    $region32: #{network_forward.1} parent=1 // pred_region
      _
    $region33: #{network_forward.1} parent=1 // pred_fallthru
      _
    %203 = vsyncpa [#allocation3], 1
    %204 = vsyncpa [#allocation5], 1

</llo_original>
